<compile_context>
chip_gen: v7x
topology: tpu7x:2x2x1
jax: 0.10.0
libtpu: 0.0.40
codegen_flags: <defaults>
</compile_context>

<pallas_src>
import functools

import jax
import jax.numpy as jnp
import numpy as np
from jax import lax
from jax.experimental import pallas as pl
from jax.experimental.pallas import tpu as pltpu

_LANE = 128
_ACC_ROWS = 8  # one f32 vreg worth of sublanes


def _combined_loss_kernel(pred_ref, tgt_ref, sq_ref, ab_ref, *,
                          tile_rows, total_rows, tiles_per_split, needs_mask):
    t = pl.program_id(1)

    @pl.when(t == 0)
    def _():
        sq_ref[...] = jnp.zeros_like(sq_ref)
        ab_ref[...] = jnp.zeros_like(ab_ref)

    diff = pred_ref[...].astype(jnp.float32) - tgt_ref[...].astype(jnp.float32)

    if needs_mask:
        # Zero out rows past the real data (partial last tile / phantom steps
        # introduced by splitting the reduction across cores).
        s = pl.program_id(0)
        logical_tile = s * tiles_per_split + t
        row0 = logical_tile * tile_rows
        row_ids = row0 + lax.broadcasted_iota(jnp.int32, (tile_rows, _LANE), 0)
        diff = jnp.where(row_ids < total_rows, diff, 0.0)

    ad = jnp.abs(diff)          # |diff|        (shares the diff vreg stream)
    sq = ad * ad                # diff^2 == |diff|^2  (2 VALU ops / element)

    # Fold (tile_rows, 128) -> (8, 128) with pure VPU adds; keep the accumulator
    # one vreg wide so the hot loop never touches the XLU or masked stores.
    sq_ref[...] += jnp.sum(sq.reshape(-1, _ACC_ROWS, _LANE), axis=0)
    ab_ref[...] += jnp.sum(ad.reshape(-1, _ACC_ROWS, _LANE), axis=0)


def combined_loss(predicted, target, weight_first=0.5, tile_rows=2048):
    """CombinedLoss.forward with first_loss=MSELoss, second_loss=L1Loss (mean)."""
    assert predicted.shape == target.shape
    n_elems = int(np.prod(predicted.shape))

    p = jnp.reshape(predicted, (-1,))
    t = jnp.reshape(target, (-1,))

    # Only copies when the flat size isn't lane aligned; padded lanes are zero
    # in BOTH tensors so diff==0 and they contribute nothing to either loss.
    rem = (-n_elems) % _LANE
    if rem:
        p = jnp.pad(p, (0, rem))
        t = jnp.pad(t, (0, rem))
    rows = (n_elems + rem) // _LANE
    p2 = p.reshape(rows, _LANE)
    t2 = t.reshape(rows, _LANE)

    # Sublane multiple required by the input dtype (8 f32, 16 bf16, 32 for 8-bit).
    sub = max(_ACC_ROWS, 32 // jnp.dtype(predicted.dtype).itemsize)
    tile_rows = max(sub, (min(tile_rows, rows) + sub - 1) // sub * sub)

    num_tiles = pl.cdiv(rows, tile_rows)
    nsplit = 2 if num_tiles >= 2 else 1      # shard reduction over v7x's 2 TCs
    tiles_per_split = pl.cdiv(num_tiles, nsplit)
    needs_mask = (nsplit * tiles_per_split * tile_rows) != rows

    if nsplit * tiles_per_split == num_tiles:
        def data_map(s, tt):
            return (s * tiles_per_split + tt, 0)
    else:
        # Phantom steps past the real data re-read the last tile (clamped index)
        # and are fully zeroed by the in-kernel row mask.
        def data_map(s, tt):
            return (jnp.minimum(s * tiles_per_split + tt, num_tiles - 1), 0)

    kernel = functools.partial(
        _combined_loss_kernel,
        tile_rows=tile_rows,
        total_rows=rows,
        tiles_per_split=tiles_per_split,
        needs_mask=needs_mask,
    )

    out_sq, out_ab = pl.pallas_call(
        kernel,
        out_shape=(
            jax.ShapeDtypeStruct((nsplit * _ACC_ROWS, _LANE), jnp.float32),
            jax.ShapeDtypeStruct((nsplit * _ACC_ROWS, _LANE), jnp.float32),
        ),
        grid_spec=pltpu.PrefetchScalarGridSpec(
            num_scalar_prefetch=0,
            grid=(nsplit, tiles_per_split),
            in_specs=[
                pl.BlockSpec((tile_rows, _LANE), data_map),
                pl.BlockSpec((tile_rows, _LANE), data_map),
            ],
            out_specs=[
                pl.BlockSpec((_ACC_ROWS, _LANE), lambda s, tt: (s, 0)),
                pl.BlockSpec((_ACC_ROWS, _LANE), lambda s, tt: (s, 0)),
            ],
        ),
        compiler_params=pltpu.CompilerParams(
            dimension_semantics=("parallel", "arbitrary"),
            vmem_limit_bytes=64 * 1024 * 1024,
        ),
    )(p2, t2)

    # Final (tiny) cross-lane reduction + weighted combine in the wrapper.
    inv_n = 1.0 / float(n_elems)
    mse = jnp.sum(out_sq) * inv_n
    mae = jnp.sum(out_ab) * inv_n
    w = float(weight_first)
    return w * mse + (1.0 - w) * mae


if __name__ == "__main__":
    key = jax.random.PRNGKey(0)
    kp, kt = jax.random.split(key)
    # small shapes consistent with super-resolution image tensors (NCHW)
    predicted = jax.random.normal(kp, (2, 4, 16, 16), dtype=jnp.float32)
    target = jax.random.normal(kt, (2, 4, 16, 16), dtype=jnp.float32)

    weight_first = 0.5
    loss = combined_loss(predicted, target, weight_first=weight_first)
    loss = jax.block_until_ready(loss)

    # pure-JAX reference: 0.5 * MSE + 0.5 * L1
    diff = predicted - target
    ref = weight_first * jnp.mean(diff * diff) + (1.0 - weight_first) * jnp.mean(
        jnp.abs(diff))
    ref = jax.block_until_ready(ref)

    if not np.allclose(np.asarray(loss), np.asarray(ref), rtol=1e-5, atol=1e-6):
        raise AssertionError(f"mismatch: kernel={loss} ref={ref}")
    print("KERNEL_OK")
</pallas_src>

<mosaic_0001>
module attributes {stable_mosaic.version = 11 : i64} {
  func.func @_combined_loss_kernel(%arg0: i32, %arg1: i32, %arg2: memref<16x128xf32, #tpu.memory_space<vmem>>, %arg3: memref<16x128xf32, #tpu.memory_space<vmem>>, %arg4: memref<8x128xf32, #tpu.memory_space<vmem>>, %arg5: memref<8x128xf32, #tpu.memory_space<vmem>>) attributes {dimension_semantics = [#tpu.dimension_semantics<parallel>, #tpu.dimension_semantics<arbitrary>], iteration_bounds = array<i64: 1, 1>, scalar_prefetch = 0 : i64, scratch_operands = 0 : i64, tpu.core_type = #tpu.core_type<tc>, window_params = [{transform_indices = @transform_0, window_bounds = array<i64: 16, 128>}, {transform_indices = @transform_1, window_bounds = array<i64: 16, 128>}, {transform_indices = @transform_2, window_bounds = array<i64: 8, 128>}, {transform_indices = @transform_3, window_bounds = array<i64: 8, 128>}]} {
    %c0_i32 = arith.constant 0 : i32
    %0 = arith.cmpi eq, %arg1, %c0_i32 : i32
    %1 = arith.extui %0 : i1 to i32
    %c0_i32_0 = arith.constant 0 : i32
    %2 = arith.cmpi ne, %1, %c0_i32_0 : i32
    scf.if %2 {
      %cst_13 = arith.constant 0.000000e+00 : f32
      %18 = vector.broadcast %cst_13 : f32 to vector<8x128xf32>
      %c0_14 = arith.constant 0 : index
      %c0_15 = arith.constant 0 : index
      %19 = vector.load %arg4[%c0_14, %c0_15] : memref<8x128xf32, #tpu.memory_space<vmem>>, vector<8x128xf32>
      tpu.vector_store %arg4[%c0_14, %c0_15], %18 {strides = array<i32>} : memref<8x128xf32, #tpu.memory_space<vmem>>, vector<8x128xf32>,
      %cst_16 = arith.constant 0.000000e+00 : f32
      %20 = vector.broadcast %cst_16 : f32 to vector<8x128xf32>
      %c0_17 = arith.constant 0 : index
      %c0_18 = arith.constant 0 : index
      %21 = vector.load %arg5[%c0_17, %c0_18] : memref<8x128xf32, #tpu.memory_space<vmem>>, vector<8x128xf32>
      tpu.vector_store %arg5[%c0_17, %c0_18], %20 {strides = array<i32>} : memref<8x128xf32, #tpu.memory_space<vmem>>, vector<8x128xf32>,
    } else {
    }
    %c0 = arith.constant 0 : index
    %c0_1 = arith.constant 0 : index
    %3 = vector.load %arg2[%c0, %c0_1] : memref<16x128xf32, #tpu.memory_space<vmem>>, vector<16x128xf32>
    %c0_2 = arith.constant 0 : index
    %c0_3 = arith.constant 0 : index
    %4 = vector.load %arg3[%c0_2, %c0_3] : memref<16x128xf32, #tpu.memory_space<vmem>>, vector<16x128xf32>
    %5 = arith.subf %3, %4 : vector<16x128xf32>
    %6 = math.absf %5 : vector<16x128xf32>
    %7 = arith.mulf %6, %6 : vector<16x128xf32>
    %c0_4 = arith.constant 0 : index
    %c0_5 = arith.constant 0 : index
    %8 = vector.load %arg4[%c0_4, %c0_5] : memref<8x128xf32, #tpu.memory_space<vmem>>, vector<8x128xf32>
    %9 = vector.shape_cast %7 : vector<16x128xf32> to vector<2x8x128xf32>
    %cst = arith.constant dense<0.000000e+00> : vector<8x128xf32>
    %10 = vector.multi_reduction <add>, %9, %cst [0] : vector<2x8x128xf32> to vector<8x128xf32>
    %11 = arith.addf %8, %10 : vector<8x128xf32>
    %c0_6 = arith.constant 0 : index
    %c0_7 = arith.constant 0 : index
    %12 = vector.load %arg4[%c0_6, %c0_7] : memref<8x128xf32, #tpu.memory_space<vmem>>, vector<8x128xf32>
    tpu.vector_store %arg4[%c0_6, %c0_7], %11 {strides = array<i32>} : memref<8x128xf32, #tpu.memory_space<vmem>>, vector<8x128xf32>,
    %c0_8 = arith.constant 0 : index
    %c0_9 = arith.constant 0 : index
    %13 = vector.load %arg5[%c0_8, %c0_9] : memref<8x128xf32, #tpu.memory_space<vmem>>, vector<8x128xf32>
    %14 = vector.shape_cast %6 : vector<16x128xf32> to vector<2x8x128xf32>
    %cst_10 = arith.constant dense<0.000000e+00> : vector<8x128xf32>
    %15 = vector.multi_reduction <add>, %14, %cst_10 [0] : vector<2x8x128xf32> to vector<8x128xf32>
    %16 = arith.addf %13, %15 : vector<8x128xf32>
    %c0_11 = arith.constant 0 : index
    %c0_12 = arith.constant 0 : index
    %17 = vector.load %arg5[%c0_11, %c0_12] : memref<8x128xf32, #tpu.memory_space<vmem>>, vector<8x128xf32>
    tpu.vector_store %arg5[%c0_11, %c0_12], %16 {strides = array<i32>} : memref<8x128xf32, #tpu.memory_space<vmem>>, vector<8x128xf32>,
    return
  }
  func.func @transform_0(%arg0: i32, %arg1: i32) -> (i32, i32) {
    %c1_i32 = arith.constant 1 : i32
    %0 = arith.muli %arg0, %c1_i32 : i32
    %1 = arith.addi %0, %arg1 : i32
    %c0_i32 = arith.constant 0 : i32
    %c0_i32_0 = arith.constant 0 : i32
    return %1, %c0_i32 : i32, i32
  }
  func.func @transform_1(%arg0: i32, %arg1: i32) -> (i32, i32) {
    %c1_i32 = arith.constant 1 : i32
    %0 = arith.muli %arg0, %c1_i32 : i32
    %1 = arith.addi %0, %arg1 : i32
    %c0_i32 = arith.constant 0 : i32
    %c0_i32_0 = arith.constant 0 : i32
    return %1, %c0_i32 : i32, i32
  }
  func.func @transform_2(%arg0: i32, %arg1: i32) -> (i32, i32) {
    %c0_i32 = arith.constant 0 : i32
    %c0_i32_0 = arith.constant 0 : i32
    return %arg0, %c0_i32 : i32, i32
  }
  func.func @transform_3(%arg0: i32, %arg1: i32) -> (i32, i32) {
    %c0_i32 = arith.constant 0 : i32
    %c0_i32_0 = arith.constant 0 : i32
    return %arg0, %c0_i32 : i32, i32
  }
}

</mosaic_0001>

<llo_original>
// kernel: tpu_custom_call.1
$region0: #{tpu_custom_call.1}
  #allocation0 [shape = 'u32[]', space=smem, size = 0x4, offset = 0x4, fixed_abs, tag = 'smem constant byte address 0x4 - core index']
  #allocation1 [shape = 'u32[144,128]{1,0:T(1,128)}', space=vmem, size = 0x12000, scoped, tag = 'internal scratch']
  %s0 = inlined_call_operand.hbm [shape: f32[16,128], index: 0, kind: input, shape index: {}]
  %s1 = inlined_call_operand.hbm [shape: f32[16,128], index: 1, kind: input, shape index: {}]
  %s2 = inlined_call_operand.hbm [shape: f32[8,128], index: 2, kind: output, shape index: {0}]
  %s3 = inlined_call_operand.hbm [shape: f32[8,128], index: 3, kind: output, shape index: {1}]
  %4 = xla_tuple %s2, %s3
  %s5 = sld [smem:[#allocation0]]
  $region38: #{tpu_custom_call.1} parent=0
    _
  %s7 = ssub.s32 1, %s5
  %s8 = scalar_select 0, %s7, %s5
  $region1: #{tpu_custom_call.1} parent=0
    #allocation2 [shape = 'u8[8192]{0}', space=vmem, size = 0x2000, scoped, tag = 'input window, operand 0, single buffered']
    #allocation3 [shape = 's32[1]{0}', space=sflag, size = 0x4, scoped, tag = 'scoped memory for tpu_custom_call.1']
    #allocation4 [shape = 's32[1]{0}', space=sflag, size = 0x4, scoped, tag = 'scoped memory for tpu_custom_call.1']
    #allocation5 [shape = 'u8[8192]{0}', space=vmem, size = 0x2000, scoped, tag = 'input window, operand 1, single buffered']
    #allocation6 [shape = 's32[1]{0}', space=sflag, size = 0x4, scoped, tag = 'scoped memory for tpu_custom_call.1']
    #allocation7 [shape = 'u8[4096]{0}', space=vmem, size = 0x1000, scoped, tag = 'output window, operand 0, single buffered']
    #allocation8 [shape = 'u8[4096]{0}', space=vmem, size = 0x1000, scoped, tag = 'output window, operand 1, single buffered']
    #allocation9 [shape = 's32[1]{0}', space=sflag, size = 0x4, scoped, tag = 'scoped memory for tpu_custom_call.1']
    %9 = vsyncpa [#allocation3], 0
    %10 = vsyncpa [#allocation6], 0
    %11 = vsyncpa [#allocation4], 0
    %12 = vsyncpa [#allocation9], 0
    // Predicated region
    $region2: #{tpu_custom_call.1} parent=1 // pred_check
      _
    $region3: #{tpu_custom_call.1} parent=1 // pred_check_branch
      %14 = sbr.rel (0) target = $region5
    $region4: #{tpu_custom_call.1} parent=1 // pred_region
      %s15 = sadd.s32 0, 0
      %s16 = smul.u32 2, %s15
      %s18 = ssub.s32 256, 256
      %19 = vsyncadd [#allocation3], %s18
      %s20 = smul.addr %s16, 128
      %s21 = scalar_lea.hbm %s0, %s20
      %s22 = sshll.u32 [#allocation2], 4
      %s23 = int_to_ptr.vmem [resolvable:$true] %s22
      %28 = dma.hbm_to_vmem [thread:$0]  %s21, 256, %s23, [#allocation3], 128, 128, 8
    $region5: #{tpu_custom_call.1} parent=1 // pred_fallthru
      _
    // Predicated region
    $region6: #{tpu_custom_call.1} parent=1 // pred_check
      _
    $region7: #{tpu_custom_call.1} parent=1 // pred_check_branch
      %30 = sbr.rel (0) target = $region9
    $region8: #{tpu_custom_call.1} parent=1 // pred_region
      %s31 = sadd.s32 0, 0
      %s32 = smul.u32 2, %s31
      %s34 = ssub.s32 256, 256
      %35 = vsyncadd [#allocation6], %s34
      %s36 = smul.addr %s32, 128
      %s37 = scalar_lea.hbm %s1, %s36
      %s38 = sshll.u32 [#allocation5], 4
      %s39 = int_to_ptr.vmem [resolvable:$true] %s38
      %44 = dma.hbm_to_vmem [thread:$0]  %s37, 256, %s39, [#allocation6], 128, 128, 8
    $region9: #{tpu_custom_call.1} parent=1 // pred_fallthru
      _
    // Predicated region
    $region10: #{tpu_custom_call.1} parent=1 // pred_check
      _
    $region11: #{tpu_custom_call.1} parent=1 // pred_check_branch
      %46 = sbr.rel (0) target = $region13
    $region12: #{tpu_custom_call.1} parent=1 // pred_region
      %47 = dma.done [#allocation3], 256
    $region13: #{tpu_custom_call.1} parent=1 // pred_fallthru
      _
    // Predicated region
    $region14: #{tpu_custom_call.1} parent=1 // pred_check
      _
    $region15: #{tpu_custom_call.1} parent=1 // pred_check_branch
      %49 = sbr.rel (0) target = $region17
    $region16: #{tpu_custom_call.1} parent=1 // pred_region
      %50 = dma.done [#allocation6], 256
    $region17: #{tpu_custom_call.1} parent=1 // pred_fallthru
      _
    %s51 = sadd.s32 0, 0
    %s52 = smul.u32 2, %s51
    %s53 = sadd.s32 0, 0
    %s54 = smul.u32 2, %s53
    %p55 = scmp.eq.s32.totalorder 0, 0
    // Predicated region
    $region18: #{tpu_custom_call.1} parent=1 // pred_check
      %p56 = pneg %p55
    $region19: #{tpu_custom_call.1} parent=1 // pred_check_branch
      %58 = sbr.rel (%p56) target = $region21
    $region20: #{tpu_custom_call.1} parent=1 // pred_region
      %59 = vst [vmem:[#allocation7] sm:$0xff] 0.0
      %60 = vst [vmem:[#allocation8] sm:$0xff] 0.0
    $region21: #{tpu_custom_call.1} parent=1 // pred_fallthru
      _
    %v61 = vld [vmem:[#allocation2] sm:$0xff]
    %v62 = vld [vmem:[#allocation2 + $0x8] sm:$0xff]
    %v63 = vld [vmem:[#allocation5] sm:$0xff]
    %v64 = vld [vmem:[#allocation5 + $0x8] sm:$0xff]
    %v65 = vsub.f32 %v61, %v63
    %v66 = vsub.f32 %v62, %v64
    %v67 = vand.u32 2147483647, %v65
    %v68 = vand.u32 2147483647, %v66
    %v69 = vmul.f32 %v67, %v67
    %v70 = vmul.f32 %v68, %v68
    %v71 = vld [vmem:[#allocation7] sm:$0xff]
    %v72 = vadd.f32 %v69, %v70
    %v73 = vadd.f32 %v71, %v72
    %74 = vst [vmem:[#allocation7] sm:$0xff] %v73
    %v75 = vld [vmem:[#allocation8] sm:$0xff]
    %v76 = vadd.f32 %v67, %v68
    %v77 = vadd.f32 %v75, %v76
    %78 = vst [vmem:[#allocation8] sm:$0xff] %v77
    // Predicated region
    $region22: #{tpu_custom_call.1} parent=1 // pred_check
      _
    $region23: #{tpu_custom_call.1} parent=1 // pred_check_branch
      %80 = sbr.rel (0) target = $region25
    $region24: #{tpu_custom_call.1} parent=1 // pred_region
      %s82 = ssub.s32 128, 128
      %83 = vsyncadd [#allocation4], %s82
      %s85 = sshll.u32 [#allocation7], 4
      %s86 = int_to_ptr.vmem [resolvable:$true] %s85
      %88 = dma.vmem_to_hbm [thread:$0]  %s86, 128, %s2, [#allocation4]
    $region25: #{tpu_custom_call.1} parent=1 // pred_fallthru
      _
    // Predicated region
    $region26: #{tpu_custom_call.1} parent=1 // pred_check
      _
    $region27: #{tpu_custom_call.1} parent=1 // pred_check_branch
      %90 = sbr.rel (0) target = $region29
    $region28: #{tpu_custom_call.1} parent=1 // pred_region
      %s92 = ssub.s32 128, 128
      %93 = vsyncadd [#allocation9], %s92
      %s95 = sshll.u32 [#allocation8], 4
      %s96 = int_to_ptr.vmem [resolvable:$true] %s95
      %98 = dma.vmem_to_hbm [thread:$0]  %s96, 128, %s3, [#allocation9]
    $region29: #{tpu_custom_call.1} parent=1 // pred_fallthru
      _
    // Predicated region
    $region30: #{tpu_custom_call.1} parent=1 // pred_check
      _
    $region31: #{tpu_custom_call.1} parent=1 // pred_check_branch
      %100 = sbr.rel (0) target = $region33
    $region32: #{tpu_custom_call.1} parent=1 // pred_region
      %101 = dma.done [#allocation4], 128
    $region33: #{tpu_custom_call.1} parent=1 // pred_fallthru
      _
    // Predicated region
    $region34: #{tpu_custom_call.1} parent=1 // pred_check
      _
    $region35: #{tpu_custom_call.1} parent=1 // pred_check_branch
      %103 = sbr.rel (0) target = $region37
    $region36: #{tpu_custom_call.1} parent=1 // pred_region
      %104 = dma.done [#allocation9], 128
    $region37: #{tpu_custom_call.1} parent=1 // pred_fallthru
      _
    %105 = vsyncpa [#allocation3], 1
    %106 = vsyncpa [#allocation6], 1
    %107 = vsyncpa [#allocation4], 1
    %108 = vsyncpa [#allocation9], 1

</llo_original>
